<compile_context>
chip_gen: v7x
topology: tpu7x:2x2x1
jax: 0.10.0
libtpu: 0.0.40
codegen_flags: <defaults>
</compile_context>

<pallas_src>
import re

import jax
import jax.numpy as jnp
from jax.experimental import pallas as pl
from jax.experimental.pallas import tpu as pltpu

_MIB = 1024 * 1024


# --------------------------------------------------------------------------
# Kernel 1: conditioning path  (silu(emb) @ W + b, chunked into 6)
# --------------------------------------------------------------------------
def _cond_proj_kernel(emb_ref, w_ref, b_ref, mod_ref):
    """Produce one D-wide chunk of the packed modulation slab.

    emb_ref: (B, D)     conditioning vectors (tiny, resident)
    w_ref:   (D, D)     chunk j of the (D, 6D) weight
    b_ref:   (6, D)     full bias, resident; row j selected in-kernel
    mod_ref: (1, B, D)  chunk j of the packed f32 modulation output
    Chunk 1 (scale_msa) is stored with +1 already folded in.
    """
    j = pl.program_id(0)
    emb = emb_ref[...].astype(jnp.float32)
    silu = emb * jax.nn.sigmoid(emb)                       # tiny, recompute per chunk
    proj = jnp.dot(silu.astype(w_ref.dtype), w_ref[...],   # MXU, native-dtype operands
                   preferred_element_type=jnp.float32)
    proj = proj + b_ref[pl.ds(j, 1), :].astype(jnp.float32)      # (1, D) -> broadcast B
    offset = jnp.where(j == 1, 1.0, 0.0).astype(jnp.float32)     # fold +1 into scale_msa
    mod_ref[...] = (proj + offset)[None].astype(mod_ref.dtype)


# --------------------------------------------------------------------------
# Kernel 2: hot path  (LayerNorm(eps=1e-6, no affine) + AdaLN-Zero modulate)
# --------------------------------------------------------------------------
def _ln_modulate_kernel(x_ref, mod_ref, o_ref):
    """x_ref/o_ref: (1, TILE_T, D); mod_ref: (2, B, D) resident f32 slab
    (row 0 = shift_msa, row 1 = 1 + scale_msa)."""
    bi = pl.program_id(1)
    x = x_ref[...].astype(jnp.float32)
    inv_d = jnp.float32(1.0 / x.shape[-1])
    # two-pass mean / variance (matches torch LayerNorm numerics more closely
    # than E[x^2]-E[x]^2, important for bf16 activations with large offsets)
    mean = jnp.sum(x, axis=-1, keepdims=True) * inv_d
    xc = x - mean
    var = jnp.sum(xc * xc, axis=-1, keepdims=True) * inv_d
    xn = xc * jax.lax.rsqrt(var + jnp.float32(1e-6))
    shift = mod_ref[pl.ds(0, 1), pl.ds(bi, 1), :]        # (1, 1, D) f32
    scale1 = mod_ref[pl.ds(1, 1), pl.ds(bi, 1), :]       # (1, 1, D) f32 == 1 + scale_msa
    # TODO(synk): on v7x with bf16 x, consider MXU-offloaded row sums (dot with a
    # ones column) / bf16 final modulate if a bundle dump shows VPU/XLU binding.
    o_ref[...] = (xn * scale1 + shift).astype(o_ref.dtype)


# --------------------------------------------------------------------------
# Generation-aware tiling / VMEM planning
# --------------------------------------------------------------------------
def _tpu_generation():
    """Best-effort TPU generation from device_kind; 0 if unknown."""
    try:
        kind = jax.devices()[0].device_kind
    except Exception:  # pragma: no cover - conservative fallback
        return 0
    m = re.search(r"(\d+)", kind)
    return int(m.group(1)) if m else 0


def _vmem_plan(gen):
    """Return (vmem_limit_bytes, per-step VMEM budget for the hot kernel)."""
    if gen >= 7:
        limit = 30 * _MIB      # v7x: 64 MiB physical, 32 MiB scoped default
    elif gen == 6:
        limit = 32 * _MIB      # v6e: 128 MiB physical, 32 MiB scoped default
    else:
        limit = 16 * _MIB      # v5e / unknown: 16 MiB scoped default
    return limit, int(0.85 * limit)


def _choose_tile_t(T, D, x_itemsize, step_budget_bytes):
    """Biggest T tile whose double-buffered in/out blocks PLUS in-kernel f32
    temporaries (x upcast, centered x, squared) fit the per-step budget."""
    bytes_per_elem = 4 * x_itemsize + 3 * 4   # 2x(in+out) dbl-buffer + ~3 f32 temps
    tt = step_budget_bytes // max(1, D * bytes_per_elem)
    tt = max(8, min(int(tt), 2048))
    tt = (tt // 8) * 8
    if T <= tt:
        return T                              # block == full dim -> always legal
    return tt


# --------------------------------------------------------------------------
# Wrapper
# --------------------------------------------------------------------------
def ada_layer_norm_zero(x, emb, w, b, *, tile_t=None):
    """x: (B,T,D), emb: (B,D), w: (D,6D), b: (6D,)."""
    B, T, D = x.shape
    assert emb.shape == (B, D)
    assert w.shape == (D, 6 * D)
    assert b.shape == (6 * D,)
    x_item = jnp.dtype(x.dtype).itemsize
    w_item = jnp.dtype(w.dtype).itemsize

    gen = _tpu_generation()
    vmem_limit, step_budget = _vmem_plan(gen)

    # ---- 1) conditioning path: only a (D, D) slab of W is VMEM-resident at a
    #         time; output is a packed f32 (6, B, D) slab.
    # TODO(synk): if D > 1024 on v5e, additionally split the (D, D) chunk along N
    # (grid=(6, D//512)) or keep W in bf16 to stay under the 16 MiB scoped VMEM.
    mod = pl.pallas_call(
        _cond_proj_kernel,
        out_shape=jax.ShapeDtypeStruct((6, B, D), jnp.float32),
        grid=(6,),
        in_specs=[
            pl.BlockSpec((B, D), lambda j: (0, 0)),
            pl.BlockSpec((D, D), lambda j: (0, j)),
            pl.BlockSpec((6, D), lambda j: (0, 0)),     # fully resident bias
        ],
        out_specs=pl.BlockSpec((1, B, D), lambda j: (j, 0, 0)),
        compiler_params=pltpu.CompilerParams(
            dimension_semantics=("parallel",),
            vmem_limit_bytes=vmem_limit),
        cost_estimate=pl.CostEstimate(
            flops=int(2 * B * D * 6 * D + 4 * 6 * B * D),
            transcendentals=int(6 * B * D),
            bytes_accessed=int(6 * D * D * w_item
                               + B * D * jnp.dtype(emb.dtype).itemsize
                               + 6 * D * jnp.dtype(b.dtype).itemsize
                               + 6 * B * D * 4),
        ),
    )(emb, w, b.reshape(6, D))

    # ---- 2) hot path: tiled, auto-pipelined LayerNorm / modulate.
    #         T-tile axis leads the grid so megacore always gets work at B=1..2.
    if tile_t is None:
        tile_t = _choose_tile_t(T, D, x_item, step_budget)
    grid = (pl.cdiv(T, tile_t), B)

    y = pl.pallas_call(
        _ln_modulate_kernel,
        out_shape=jax.ShapeDtypeStruct((B, T, D), x.dtype),
        grid=grid,
        in_specs=[
            pl.BlockSpec((1, tile_t, D), lambda ti, bi: (bi, ti, 0)),
            pl.BlockSpec((2, B, D), lambda ti, bi: (0, 0, 0)),   # shift / 1+scale rows
        ],
        out_specs=pl.BlockSpec((1, tile_t, D), lambda ti, bi: (bi, ti, 0)),
        compiler_params=pltpu.CompilerParams(
            dimension_semantics=("parallel", "parallel"),
            vmem_limit_bytes=vmem_limit),
        cost_estimate=pl.CostEstimate(
            flops=int(10 * B * T * D),
            transcendentals=int(B * T),
            bytes_accessed=int(2 * B * T * D * x_item + 2 * B * D * 4),
        ),
    )(x, mod)

    gate_msa, shift_mlp, scale_mlp, gate_mlp = mod[2], mod[3], mod[4], mod[5]

    # TODO(synk): TRT-LLM `remove_input_padding` packed 2-D x path not implemented;
    # this kernel covers the padded (B, T, D) branch.
    return y, gate_msa, shift_mlp, scale_mlp, gate_mlp


# --------------------------------------------------------------------------
# Pure-JAX reference (mirrors the PyTorch forward)
# --------------------------------------------------------------------------
def _reference(x, emb, w, b):
    silu = emb * jax.nn.sigmoid(emb)
    proj = silu @ w + b
    D = x.shape[-1]
    shift_msa, scale_msa, gate_msa, shift_mlp, scale_mlp, gate_mlp = [
        proj[:, i * D:(i + 1) * D] for i in range(6)
    ]
    mean = jnp.mean(x, axis=-1, keepdims=True)
    var = jnp.mean((x - mean) ** 2, axis=-1, keepdims=True)
    xn = (x - mean) / jnp.sqrt(var + 1e-6)
    y = xn * (1.0 + scale_msa[:, None, :]) + shift_msa[:, None, :]
    return y, gate_msa, shift_mlp, scale_mlp, gate_mlp


if __name__ == "__main__":
    key = jax.random.PRNGKey(0)
    kx, kemb, kw, kb = jax.random.split(key, 4)

    B, D = 2, 128
    emb = jax.random.normal(kemb, (B, D), dtype=jnp.float32)
    # Deterministic "Linear(dim, dim*6)" parameters (not a checkpoint load).
    w = jax.random.normal(kw, (D, 6 * D), dtype=jnp.float32) * (1.0 / jnp.sqrt(D))
    b = jax.random.normal(kb, (6 * D,), dtype=jnp.float32) * 0.02

    # (T, tile_t, w dtype, tol): auto single tile, exact multi-tile grid,
    # partial last tile, and bf16-streamed W (perf path) with loose tolerance.
    cases = [
        (48, None, jnp.float32, 1e-4),
        (48, 16, jnp.float32, 1e-4),
        (40, 16, jnp.float32, 1e-4),
        (64, None, jnp.bfloat16, 3e-2),
    ]
    for T, tile_t, w_dtype, tol in cases:
        x = jax.random.normal(kx, (B, T, D), dtype=jnp.float32)
        w_c = w.astype(w_dtype)
        outs = jax.block_until_ready(
            ada_layer_norm_zero(x, emb, w_c, b, tile_t=tile_t))
        refs = _reference(x, emb, w_c, b)
        for o, r in zip(outs, refs):
            assert o.shape == r.shape and o.dtype == r.dtype, (o.shape, o.dtype)
            assert jnp.allclose(o, r, atol=tol, rtol=tol), "numerical mismatch"

    print("KERNEL_OK")
</pallas_src>

<mosaic_0001>
module attributes {stable_mosaic.version = 11 : i64} {
  func.func @_cond_proj_kernel(%arg0: i32, %arg1: memref<2x128xf32, #tpu.memory_space<vmem>>, %arg2: memref<128x128xf32, #tpu.memory_space<vmem>>, %arg3: memref<6x128xf32, #tpu.memory_space<vmem>>, %arg4: memref<1x2x128xf32, #tpu.memory_space<vmem>>) attributes {dimension_semantics = [#tpu.dimension_semantics<parallel>], iteration_bounds = array<i64: 6>, scalar_prefetch = 0 : i64, scratch_operands = 0 : i64, tpu.core_type = #tpu.core_type<tc>, window_params = [{pipeline_mode = #tpu.pipeline_mode<synchronous>, transform_indices = @transform_0, window_bounds = array<i64: 2, 128>}, {transform_indices = @transform_1, window_bounds = array<i64: 128, 128>}, {pipeline_mode = #tpu.pipeline_mode<synchronous>, transform_indices = @transform_2, window_bounds = array<i64: 6, 128>}, {transform_indices = @transform_3, window_bounds = array<i64: 1, 2, 128>}]} {
    %c0 = arith.constant 0 : index
    %c0_0 = arith.constant 0 : index
    %0 = vector.load %arg1[%c0, %c0_0] : memref<2x128xf32, #tpu.memory_space<vmem>>, vector<2x128xf32>
    %1 = arith.negf %0 : vector<2x128xf32>
    %2 = math.exp %1 : vector<2x128xf32>
    %cst = arith.constant 1.000000e+00 : f32
    %3 = vector.broadcast %cst : f32 to vector<2x128xf32>
    %4 = arith.addf %3, %2 : vector<2x128xf32>
    %5 = arith.divf %3, %4 : vector<2x128xf32>
    %6 = arith.mulf %0, %5 : vector<2x128xf32>
    %c0_1 = arith.constant 0 : index
    %c0_2 = arith.constant 0 : index
    %7 = vector.load %arg2[%c0_1, %c0_2] : memref<128x128xf32, #tpu.memory_space<vmem>>, vector<128x128xf32>
    %cst_3 = arith.constant dense<0.000000e+00> : vector<2x128xf32>
    %8 = tpu.matmul %6, %7, %cst_3 {dimension_numbers = #tpu.dot_dimension_numbers<[1], [0], [0], [1], [0, 0, 1, 1], [], []>} : vector<2x128xf32>, vector<128x128xf32>, vector<2x128xf32> -> vector<2x128xf32>
    %9 = arith.index_cast %arg0 : i32 to index
    %c0_4 = arith.constant 0 : index
    %10 = vector.load %arg3[%9, %c0_4] : memref<6x128xf32, #tpu.memory_space<vmem>>, vector<1x128xf32>
    %11 = vector.broadcast %10 : vector<1x128xf32> to vector<2x128xf32>
    %12 = arith.addf %8, %11 : vector<2x128xf32>
    %c1_i32 = arith.constant 1 : i32
    %13 = arith.cmpi eq, %arg0, %c1_i32 : i32
    %cst_5 = arith.constant 1.000000e+00 : f32
    %cst_6 = arith.constant 0.000000e+00 : f32
    %14 = arith.select %13, %cst_5, %cst_6 : f32
    %15 = vector.broadcast %14 : f32 to vector<2x128xf32>
    %16 = arith.addf %12, %15 : vector<2x128xf32>
    %17 = vector.shape_cast %16 : vector<2x128xf32> to vector<1x2x128xf32>
    %c0_7 = arith.constant 0 : index
    %c0_8 = arith.constant 0 : index
    %c0_9 = arith.constant 0 : index
    %18 = vector.load %arg4[%c0_7, %c0_8, %c0_9] : memref<1x2x128xf32, #tpu.memory_space<vmem>>, vector<1x2x128xf32>
    tpu.vector_store %arg4[%c0_7, %c0_8, %c0_9], %17 {strides = array<i32>} : memref<1x2x128xf32, #tpu.memory_space<vmem>>, vector<1x2x128xf32>,
    return
  }
  func.func @transform_0(%arg0: i32) -> (i32, i32) {
    %c0_i32 = arith.constant 0 : i32
    %c0_i32_0 = arith.constant 0 : i32
    %c0_i32_1 = arith.constant 0 : i32
    return %c0_i32, %c0_i32_0 : i32, i32
  }
  func.func @transform_1(%arg0: i32) -> (i32, i32) {
    %c0_i32 = arith.constant 0 : i32
    %c0_i32_0 = arith.constant 0 : i32
    return %c0_i32, %arg0 : i32, i32
  }
  func.func @transform_2(%arg0: i32) -> (i32, i32) {
    %c0_i32 = arith.constant 0 : i32
    %c0_i32_0 = arith.constant 0 : i32
    %c0_i32_1 = arith.constant 0 : i32
    return %c0_i32, %c0_i32_0 : i32, i32
  }
  func.func @transform_3(%arg0: i32) -> (i32, i32, i32) {
    %c0_i32 = arith.constant 0 : i32
    %c0_i32_0 = arith.constant 0 : i32
    %c0_i32_1 = arith.constant 0 : i32
    return %arg0, %c0_i32, %c0_i32_0 : i32, i32, i32
  }
}

</mosaic_0001>

<llo_original>
// kernel: tpu_custom_call.1
$region0: #{tpu_custom_call.1}
  #allocation0 [shape = 'u32[]', space=smem, size = 0x4, offset = 0x4, fixed_abs, tag = 'smem constant byte address 0x4 - core index']
  #allocation1 [shape = 'u32[144,128]{1,0:T(1,128)}', space=vmem, size = 0x12000, scoped, tag = 'internal scratch']
  %s0 = inlined_call_operand.hbm [shape: f32[2,128], index: 0, kind: input, shape index: {}]
  %s1 = inlined_call_operand.hbm [shape: f32[128,768], index: 1, kind: input, shape index: {}]
  %s2 = inlined_call_operand.hbm [shape: f32[6,128], index: 2, kind: input, shape index: {}]
  %s3 = inlined_call_operand.hbm [shape: f32[6,2,128], index: 3, kind: output, shape index: {}]
  %s4 = sld [smem:[#allocation0]]
  $region57: #{tpu_custom_call.1} parent=0
    _
  %s6 = ssub.s32 1, %s4
  %s7 = scalar_select 0, %s6, %s4
  $region1: #{tpu_custom_call.1} parent=0
    #allocation2 [shape = 'u8[1024]{0}', space=vmem, size = 0x400, scoped, tag = 'input window, operand 0, single buffered']
    #allocation3 [shape = 's32[2]{0}', space=sflag, size = 0x8, scoped, tag = 'scoped memory for tpu_custom_call.1']
    #allocation4 [shape = 's32[2]{0}', space=sflag, size = 0x8, scoped, tag = 'scoped memory for tpu_custom_call.1']
    #allocation5 [shape = 'u8[131072]{0}', space=vmem, size = 0x20000, scoped, tag = 'input window, operand 1']
    #allocation6 [shape = 's32[2]{0}', space=sflag, size = 0x8, scoped, tag = 'scoped memory for tpu_custom_call.1']
    #allocation7 [shape = 'u8[4096]{0}', space=vmem, size = 0x1000, scoped, tag = 'input window, operand 2, single buffered']
    #allocation8 [shape = 'u8[2048]{0}', space=vmem, size = 0x800, scoped, tag = 'output window, operand 0']
    %8 = vsyncpa [#allocation3], 0
    %9 = vsyncpa [#allocation6], 0
    %s10 = scalar_lea.sflag [#allocation6], 1
    %11 = vsyncpa %s10, 0
    %12 = vsyncpa [#allocation4], 0
    %s13 = scalar_lea.sflag [#allocation4], 1
    %14 = vsyncpa %s13, 0
    loop: start=0, step=1, limit=8
    $region2: #{tpu_custom_call.1} parent=1 // loop_pre_header
      _
    $region3: #{tpu_custom_call.1} parent=1 // loop_header
      %s16 = sphi 0, %s20
      %p17 = scmp.ge.s32.totalorder %s16, 8
      %s24 = sphi 0, %s24
      %s26 = sphi 0, %s24
      %s27 = sphi 0, %s26
      %s41 = sphi 0, %s27
      %s47 = sphi 0, %s49
      %s50 = sphi 0, %s47
      %s51 = sphi 0, %s50
      %s67 = sphi 0, %s51
      %s71 = sphi 0, %s71
      %s73 = sphi 0, %s71
      %s74 = sphi 0, %s73
      %s88 = sphi 0, %s74
      %s94 = sphi 0, %s96
      %s97 = sphi 0, %s94
      %s98 = sphi 0, %s97
      %s114 = sphi 0, %s98
    $region4: #{tpu_custom_call.1} parent=1 // loop_header_branch
      %19 = sbr.rel (%p17) target = $region8
    $region5: #{tpu_custom_call.1} parent=1 // loop_body
      %s21 = ssub.s32 %s16, 1
      %s22 = ssub.s32 %s16, 2
      %s23 = sadd.s32 %s16, 1
      %s25 = sadd.s32 %s24, 1
      %p28 = scmp.eq.s32.totalorder %s16, 5
      %p29 = scmp.ne.s32.totalorder %s24, %s26
      %p30 = scmp.eq.s32.totalorder %s16, 0
      %p31 = por %p29, %p30
      %p32 = scmp.ne.s32.totalorder %s24, %s26
      %p33 = scmp.eq.s32.totalorder %s21, 5
      %p34 = por %p32, %p33
      %p35 = scmp.ne.s32.totalorder %s26, %s27
      %p36 = scmp.eq.s32.totalorder %s21, 0
      %p37 = por %p35, %p36
      %p38 = scmp.ne.s32.totalorder %s26, %s27
      %p39 = scmp.eq.s32.totalorder %s22, 5
      %p40 = por %p38, %p39
      %p42 = scmp.ne.s32.totalorder %s27, %s41
      %p43 = scmp.eq.s32.totalorder %s22, 0
      %p44 = por %p42, %p43
      %s45 = ssub.s32 %s16, %s23
      %p46 = scmp.eq.s32.totalorder %s45, 0
      %s48 = sadd.s32 %s47, 1
      %s49 = scalar_select %p46, %s47, %s48
      %p52 = pneg %p46
      %p53 = scmp.eq.s32.totalorder %s16, 5
      %p54 = por %p52, %p53
      %p55 = scmp.ne.s32.totalorder %s47, %s50
      %p56 = scmp.eq.s32.totalorder %s16, 0
      %p57 = por %p55, %p56
      %p58 = scmp.ne.s32.totalorder %s47, %s50
      %p59 = scmp.eq.s32.totalorder %s21, 5
      %p60 = por %p58, %p59
      %p61 = scmp.ne.s32.totalorder %s50, %s51
      %p62 = scmp.eq.s32.totalorder %s21, 0
      %p63 = por %p61, %p62
      %p64 = scmp.ne.s32.totalorder %s50, %s51
      %p65 = scmp.eq.s32.totalorder %s22, 5
      %p66 = por %p64, %p65
      %p68 = scmp.ne.s32.totalorder %s51, %s67
      %p69 = scmp.eq.s32.totalorder %s22, 0
      %p70 = por %p68, %p69
      %s72 = sadd.s32 %s71, 1
      %p75 = scmp.eq.s32.totalorder %s16, 5
      %p76 = scmp.ne.s32.totalorder %s71, %s73
      %p77 = scmp.eq.s32.totalorder %s16, 0
      %p78 = por %p76, %p77
      %p79 = scmp.ne.s32.totalorder %s71, %s73
      %p80 = scmp.eq.s32.totalorder %s21, 5
      %p81 = por %p79, %p80
      %p82 = scmp.ne.s32.totalorder %s73, %s74
      %p83 = scmp.eq.s32.totalorder %s21, 0
      %p84 = por %p82, %p83
      %p85 = scmp.ne.s32.totalorder %s73, %s74
      %p86 = scmp.eq.s32.totalorder %s22, 5
      %p87 = por %p85, %p86
      %p89 = scmp.ne.s32.totalorder %s74, %s88
      %p90 = scmp.eq.s32.totalorder %s22, 0
      %p91 = por %p89, %p90
      %s92 = ssub.s32 %s16, %s23
      %p93 = scmp.eq.s32.totalorder %s92, 0
      %s95 = sadd.s32 %s94, 1
      %s96 = scalar_select %p93, %s94, %s95
      %p99 = pneg %p93
      %p100 = scmp.eq.s32.totalorder %s16, 5
      %p101 = por %p99, %p100
      %p102 = scmp.ne.s32.totalorder %s94, %s97
      %p103 = scmp.eq.s32.totalorder %s16, 0
      %p104 = por %p102, %p103
      %p105 = scmp.ne.s32.totalorder %s94, %s97
      %p106 = scmp.eq.s32.totalorder %s21, 5
      %p107 = por %p105, %p106
      %p108 = scmp.ne.s32.totalorder %s97, %s98
      %p109 = scmp.eq.s32.totalorder %s21, 0
      %p110 = por %p108, %p109
      %p111 = scmp.ne.s32.totalorder %s97, %s98
      %p112 = scmp.eq.s32.totalorder %s22, 5
      %p113 = por %p111, %p112
      %p115 = scmp.ne.s32.totalorder %s98, %s114
      %p116 = scmp.eq.s32.totalorder %s22, 0
      %p117 = por %p115, %p116
      %p118 = scmp.le.s32.totalorder 1, %s16
      %p119 = scmp.lt.s32.totalorder %s16, 7
      %p120 = pnand %p118, %p119
      %p121 = pneg %p120
      // Predicated region
      $region9: #{tpu_custom_call.1} parent=5 // pred_check
        _
      $region10: #{tpu_custom_call.1} parent=5 // pred_check_branch
        %123 = sbr.rel (%p120) target = $region12
      $region11: #{tpu_custom_call.1} parent=5 // pred_region
        %s124 = ssub.s32 %s16, 1
        // Predicated region
        $region13: #{tpu_custom_call.1} parent=11 // pred_check
          %p125 = pneg %p37
        $region14: #{tpu_custom_call.1} parent=11 // pred_check_branch
          %127 = sbr.rel (%p125) target = $region16
        $region15: #{tpu_custom_call.1} parent=11 // pred_region
          %s129 = ssub.s32 32, 32
          %130 = vsyncadd [#allocation3], %s129
          %s132 = sshll.u32 [#allocation2], 4
          %s133 = int_to_ptr.vmem [resolvable:$true] %s132
          %135 = dma.hbm_to_vmem [thread:$0]  %s0, 32, %s133, [#allocation3]
        $region16: #{tpu_custom_call.1} parent=11 // pred_fallthru
          _
        // Predicated region
        $region17: #{tpu_custom_call.1} parent=11 // pred_check
          %p136 = pneg %p84
        $region18: #{tpu_custom_call.1} parent=11 // pred_check_branch
          %138 = sbr.rel (%p136) target = $region20
        $region19: #{tpu_custom_call.1} parent=11 // pred_region
          %s140 = ssub.s32 128, 128
          %141 = vsyncadd [#allocation6], %s140
          %s143 = sshll.u32 [#allocation7], 4
          %s144 = int_to_ptr.vmem [resolvable:$true] %s143
          %146 = dma.hbm_to_vmem [thread:$0]  %s2, 128, %s144, [#allocation6]
        $region20: #{tpu_custom_call.1} parent=11 // pred_fallthru
          _
      $region12: #{tpu_custom_call.1} parent=5 // pred_fallthru
        _
      %p147 = scmp.lt.s32.totalorder %s16, 6
      // Predicated region
      $region21: #{tpu_custom_call.1} parent=5 // pred_check
        %p148 = pneg %p147
      $region22: #{tpu_custom_call.1} parent=5 // pred_check_branch
        %150 = sbr.rel (%p148) target = $region24
      $region23: #{tpu_custom_call.1} parent=5 // pred_region
        // Predicated region
        $region25: #{tpu_custom_call.1} parent=23 // pred_check
          %p151 = pneg %p57
        $region26: #{tpu_custom_call.1} parent=23 // pred_check_branch
          %153 = sbr.rel (%p151) target = $region28
        $region27: #{tpu_custom_call.1} parent=23 // pred_region
          %s154 = sand.u32 %s16, 1
          %s155 = scalar_lea.sflag [#allocation6], %s154
          %s156 = sand.u32 %s47, 1
          %s157 = smul.addr %s156, 128
          %s158 = scalar_lea.vmem [#allocation5], %s157
          %s160 = ssub.s32 2048, 2048
          %161 = vsyncadd %s155, %s160
          %s162 = smul.addr %s16, 128
          %s163 = scalar_lea.hbm %s1, %s162
          %s164 = sshll.u32 %s158, 4
          %s165 = int_to_ptr.vmem [resolvable:$true] %s164
          %170 = dma.hbm_to_vmem [thread:$0]  %s163, 2048, %s165, %s155, 768, 128, 8
        $region28: #{tpu_custom_call.1} parent=23 // pred_fallthru
          _
      $region24: #{tpu_custom_call.1} parent=5 // pred_fallthru
        _
      %p171 = scmp.le.s32.totalorder 1, %s16
      %p172 = scmp.lt.s32.totalorder %s16, 7
      %p173 = pnand %p171, %p172
      %p174 = pneg %p173
      // Predicated region
      $region29: #{tpu_custom_call.1} parent=5 // pred_check
        _
      $region30: #{tpu_custom_call.1} parent=5 // pred_check_branch
        %176 = sbr.rel (%p173) target = $region32
      $region31: #{tpu_custom_call.1} parent=5 // pred_region
        %s177 = ssub.s32 %s16, 1
        // Predicated region
        $region33: #{tpu_custom_call.1} parent=31 // pred_check
          %p178 = pneg %p37
        $region34: #{tpu_custom_call.1} parent=31 // pred_check_branch
          %180 = sbr.rel (%p178) target = $region36
        $region35: #{tpu_custom_call.1} parent=31 // pred_region
          %181 = dma.done [#allocation3], 32
        $region36: #{tpu_custom_call.1} parent=31 // pred_fallthru
          _
        %s182 = sand.u32 %s21, 1
        %s183 = scalar_lea.sflag [#allocation6], %s182
        %s184 = sand.u32 %s50, 1
        %s185 = smul.addr %s184, 128
        %s186 = scalar_lea.vmem [#allocation5], %s185
        // Predicated region
        $region37: #{tpu_custom_call.1} parent=31 // pred_check
          %p187 = pneg %p63
        $region38: #{tpu_custom_call.1} parent=31 // pred_check_branch
          %189 = sbr.rel (%p187) target = $region40
        $region39: #{tpu_custom_call.1} parent=31 // pred_region
          %190 = dma.done %s183, 2048
        $region40: #{tpu_custom_call.1} parent=31 // pred_fallthru
          _
        // Predicated region
        $region41: #{tpu_custom_call.1} parent=31 // pred_check
          %p191 = pneg %p84
        $region42: #{tpu_custom_call.1} parent=31 // pred_check_branch
          %193 = sbr.rel (%p191) target = $region44
        $region43: #{tpu_custom_call.1} parent=31 // pred_region
          %194 = dma.done [#allocation6], 128
        $region44: #{tpu_custom_call.1} parent=31 // pred_fallthru
          _
        %p195 = pneg %p37
        %p196 = pneg %p34
        %s197 = sand.u32 %s21, 1
        %s198 = scalar_lea.sflag [#allocation6], %s197
        %s199 = sand.u32 %s50, 1
        %s200 = smul.addr %s199, 128
        %s201 = scalar_lea.vmem [#allocation5], %s200
        %p202 = pneg %p63
        %p203 = pneg %p60
        %p204 = pneg %p84
        %p205 = pneg %p81
        %p206 = pneg %p110
        %p207 = pneg %p107
        %s208 = sand.u32 %s97, 1
        %s209 = scalar_lea.sflag [#allocation4], %s208
        %s210 = sand.u32 %s97, 1
        %s211 = smul.addr %s210, 2
        %s212 = scalar_lea.vmem [#allocation8], %s211
        %v213 = vld [vmem:[#allocation2] sm:$0x3]
        %v214 = vxor.u32 %v213, 2147483648
        %v215 = vmul.f32 %v214, 1.442695
        %v216 = vpow.pop %v215
        %v217 = vadd.f32 %v216, 1.0
        %v218 = vrcp.pop %v217
        %v219 = vmul.f32 1.0, %v218
        %v220 = vmul.f32 %v213, %v219
        %v221 = vld [vmem:[%s186] sm:$0xff]
        %v222 = vld [vmem:[%s186 + $0x8] sm:$0xff]
        %v223 = vld [vmem:[%s186 + $0x10] sm:$0xff]
        %v224 = vld [vmem:[%s186 + $0x18] sm:$0xff]
        %v225 = vld [vmem:[%s186 + $0x20] sm:$0xff]
        %v226 = vld [vmem:[%s186 + $0x28] sm:$0xff]
        %v227 = vld [vmem:[%s186 + $0x30] sm:$0xff]
        %v228 = vld [vmem:[%s186 + $0x38] sm:$0xff]
        %v229 = vld [vmem:[%s186 + $0x40] sm:$0xff]
        %v230 = vld [vmem:[%s186 + $0x48] sm:$0xff]
        %v231 = vld [vmem:[%s186 + $0x50] sm:$0xff]
        %v232 = vld [vmem:[%s186 + $0x58] sm:$0xff]
        %v233 = vld [vmem:[%s186 + $0x60] sm:$0xff]
        %v234 = vld [vmem:[%s186 + $0x68] sm:$0xff]
        %v235 = vld [vmem:[%s186 + $0x70] sm:$0xff]
        %v236 = vld [vmem:[%s186 + $0x78] sm:$0xff]
        %s237 = scalar_lea.vmem [#allocation7], %s21
        %v238 = vld [vmem:[%s237] sm:$0x1]
        %v239 = vlaneseq
        %v240 = vshrl.u32 %v239, 7
        %v241 = vsub.s32 0, %v240
        %v242 = vrot.slane %v238, %v241
        %243 = vmatprep.subr.mxu0 0.0
        %244 = vmatpush1.msra.mxu0 %v221
        %245 = vmatprep.subr.mxu0 0.0
        %246 = vmatpush1.msra.mxu0 %v222
        %247 = vmatprep.subr.mxu0 0.0
        %248 = vmatpush1.msra.mxu0 %v223
        %249 = vmatprep.subr.mxu0 0.0
        %250 = vmatpush1.msra.mxu0 %v224
        %251 = vmatprep.subr.mxu0 0.0
        %252 = vmatpush1.msra.mxu0 %v225
        %253 = vmatprep.subr.mxu0 0.0
        %254 = vmatpush1.msra.mxu0 %v226
        %255 = vmatprep.subr.mxu0 0.0
        %256 = vmatpush1.msra.mxu0 %v227
        %257 = vmatprep.subr.mxu0 0.0
        %258 = vmatpush1.msra.mxu0 %v228
        %259 = vmatprep.subr.mxu0 0.0
        %260 = vmatpush1.msra.mxu0 %v229
        %261 = vmatprep.subr.mxu0 0.0
        %262 = vmatpush1.msra.mxu0 %v230
        %263 = vmatprep.subr.mxu0 0.0
        %264 = vmatpush1.msra.mxu0 %v231
        %265 = vmatprep.subr.mxu0 0.0
        %266 = vmatpush1.msra.mxu0 %v232
        %267 = vmatprep.subr.mxu0 0.0
        %268 = vmatpush1.msra.mxu0 %v233
        %269 = vmatprep.subr.mxu0 0.0
        %270 = vmatpush1.msra.mxu0 %v234
        %271 = vmatprep.subr.mxu0 0.0
        %272 = vmatpush1.msra.mxu0 %v235
        %273 = vmatprep.subr.mxu0 0.0
        %274 = vmatpush1.msra.mxu0 %v236
        %275 = vmatprep.subr.mxu0 0.0
        %276 = vmatpush1.msra.mxu0 0.0
        %277 = vmatprep.subr.mxu0 0.0
        %278 = vmatpush1.msra.mxu0 0.0
        %279 = vmatprep.subr.mxu0 0.0
        %280 = vmatpush1.msra.mxu0 0.0
        %281 = vmatprep.subr.mxu0 0.0
        %282 = vmatpush1.msra.mxu0 0.0
        %283 = vmatprep.subr.mxu0 0.0
        %284 = vmatpush1.msra.mxu0 0.0
        %285 = vmatprep.subr.mxu0 0.0
        %286 = vmatpush1.msra.mxu0 0.0
        %287 = vmatprep.subr.mxu0 0.0
        %288 = vmatpush1.msra.mxu0 0.0
        %289 = vmatprep.subr.mxu0 0.0
        %290 = vmatpush1.msra.mxu0 0.0
        %291 = vmatprep.subr.mxu0 0.0
        %292 = vmatpush1.msra.mxu0 0.0
        %293 = vmatprep.subr.mxu0 0.0
        %294 = vmatpush1.msra.mxu0 0.0
        %295 = vmatprep.subr.mxu0 0.0
        %296 = vmatpush1.msra.mxu0 0.0
        %297 = vmatprep.subr.mxu0 0.0
        %298 = vmatpush1.msra.mxu0 0.0
        %299 = vmatprep.subr.mxu0 0.0
        %300 = vmatpush1.msra.mxu0 0.0
        %301 = vmatprep.subr.mxu0 0.0
        %302 = vmatpush1.msra.mxu0 0.0
        %303 = vmatprep.subr.mxu0 0.0
        %304 = vmatpush1.msra.mxu0 0.0
        %305 = vmatprep.subr.mxu0 0.0
        %306 = vmatpush1.msra.mxu0 0.0
        %307 = vmatprep.mubr.f32.mxu0 0.0
        %308 = vmatmul.mubr.f32.gmra.mrb[0].mxu0 %v220
        %v309 = vpop.f32.mrb[0].mxu0
        %v310 = vadd.f32 %v242, %v309
        %v311 = vpop.f32.mrb[0].mxu0
        %312 = vdwg.mxu0
        %p313 = scmp.eq.s32.totalorder %s21, 1
        %s314 = scalar_select %p313, 1.0, 0.0
        %v315 = vstv %s314
        %v316 = vadd.f32 %v310, %v315
        %317 = vst [vmem:[%s212] sm:$0x3] %v316
        %s318 = sand.u32 %s97, 1
        %s319 = scalar_lea.sflag [#allocation4], %s318
        %s320 = sand.u32 %s97, 1
        %s321 = smul.addr %s320, 2
        %s322 = scalar_lea.vmem [#allocation8], %s321
        // Predicated region
        $region45: #{tpu_custom_call.1} parent=31 // pred_check
          %p323 = pneg %p107
        $region46: #{tpu_custom_call.1} parent=31 // pred_check_branch
          %325 = sbr.rel (%p323) target = $region48
        $region47: #{tpu_custom_call.1} parent=31 // pred_region
          %s327 = ssub.s32 32, 32
          %328 = vsyncadd %s319, %s327
          %s329 = smul.addr %s21, 32
          %s330 = scalar_lea.hbm %s3, %s329
          %s332 = sshll.u32 %s322, 4
          %s333 = int_to_ptr.vmem [resolvable:$true] %s332
          %335 = dma.vmem_to_hbm [thread:$0]  %s333, 32, %s330, %s319
        $region48: #{tpu_custom_call.1} parent=31 // pred_fallthru
          _
      $region32: #{tpu_custom_call.1} parent=5 // pred_fallthru
        _
      %p336 = scmp.le.s32.totalorder 2, %s16
      // Predicated region
      $region49: #{tpu_custom_call.1} parent=5 // pred_check
        %p337 = pneg %p336
      $region50: #{tpu_custom_call.1} parent=5 // pred_check_branch
        %339 = sbr.rel (%p337) target = $region52
      $region51: #{tpu_custom_call.1} parent=5 // pred_region
        %s340 = ssub.s32 %s16, 2
        // Predicated region
        $region53: #{tpu_custom_call.1} parent=51 // pred_check
          %p341 = pneg %p113
        $region54: #{tpu_custom_call.1} parent=51 // pred_check_branch
          %343 = sbr.rel (%p341) target = $region56
        $region55: #{tpu_custom_call.1} parent=51 // pred_region
          %s344 = sand.u32 %s98, 1
          %s345 = scalar_lea.sflag [#allocation4], %s344
          %s346 = sand.u32 %s98, 1
          %s347 = smul.addr %s346, 2
          %s348 = scalar_lea.vmem [#allocation8], %s347
          %349 = dma.done %s345, 32
        $region56: #{tpu_custom_call.1} parent=51 // pred_fallthru
          _
      $region52: #{tpu_custom_call.1} parent=5 // pred_fallthru
        _
    $region6: #{tpu_custom_call.1} parent=1 // loop_footer
      %s20 = sadd.s32 1, %s16
    $region7: #{tpu_custom_call.1} parent=1 // loop_footer_branch
      %15 = sbr.rel target = $region3
    $region8: #{tpu_custom_call.1} parent=1 // loop_exit
      _
    %350 = vsyncpa [#allocation3], 1
    %s351 = scalar_lea.sflag [#allocation3], 1
    %352 = vsyncpa %s351, 1
    %353 = vsyncpa [#allocation6], 1
    %s354 = scalar_lea.sflag [#allocation6], 1
    %355 = vsyncpa %s354, 1
    %356 = vsyncpa [#allocation4], 1
    %s357 = scalar_lea.sflag [#allocation4], 1
    %358 = vsyncpa %s357, 1

</llo_original>
